<compile_context>
chip_gen: v6e
topology: v6e:2x2x1
jax: 0.10.0
libtpu: 0.0.40
codegen_flags: <defaults>
</compile_context>

<pallas_src>
import jax
import jax.numpy as jnp
from jax import lax
from jax.experimental import pallas as pl
from jax.experimental.pallas import tpu as pltpu


def fused_add_linear_relu_kernel(x_ref, y_ref, w_ref, b_ref, o_ref):
    # z = x + y                      (B, In)
    # acc = z @ W^T + b              (B, Out_pad), W kept as (Out_pad, In)
    # o = relu(acc)                  lane-dense (Out_pad = 128) store
    z = x_ref[...] + y_ref[...]
    acc = lax.dot_general(
        z, w_ref[...],
        dimension_numbers=(((1,), (1,)), ((), ())),   # contract In with In
        preferred_element_type=jnp.float32,
    )
    acc = acc + b_ref[...]                            # (1, Out_pad) broadcast
    o_ref[...] = jnp.maximum(acc, 0.0).astype(o_ref.dtype)


def fused_add_linear_relu(x, y, weight, bias, *, lane=128):
    """relu((x + y) @ weight.T + bias).

    x, y: (B, In); weight: (Out, In) PyTorch convention; bias: (Out,).
    """
    B, In = x.shape
    Out = weight.shape[0]

    # Pad the output-feature axis up to a multiple of 128 lanes so the kernel's
    # output store is unmasked/lane-dense; padded rows of W / entries of b are
    # zero and are sliced away below.
    out_pad = ((Out + lane - 1) // lane) * lane
    w_pad = jnp.pad(weight, ((0, out_pad - Out), (0, 0)))          # (Out_pad, In)
    b_pad = jnp.pad(bias, (0, out_pad - Out)).reshape(1, out_pad)  # (1, Out_pad)

    vmem = pl.BlockSpec(memory_space=pltpu.MemorySpace.VMEM)
    out_padded = pl.pallas_call(
        fused_add_linear_relu_kernel,
        out_shape=jax.ShapeDtypeStruct((B, out_pad), x.dtype),
        in_specs=[vmem, vmem, vmem, vmem],
        out_specs=vmem,
    )(x, y, w_pad, b_pad)

    return out_padded[:, :Out]


def reference(x, y, weight, bias):
    return jnp.maximum((x + y) @ weight.T + bias, 0.0)


if __name__ == "__main__":
    key = jax.random.PRNGKey(0)
    k_x, k_y, k_w, k_b = jax.random.split(key, 4)

    B, In, Out = 8, 100, 10   # Linear(100, 10), batch of 8 (matches the spec)

    x = jax.random.normal(k_x, (B, In), dtype=jnp.float32)
    y = jax.random.normal(k_y, (B, In), dtype=jnp.float32)

    # Deterministic parameter init mimicking nn.Linear default:
    # uniform(-1/sqrt(in_features), 1/sqrt(in_features))
    bound = 1.0 / jnp.sqrt(jnp.float32(In))
    weight = jax.random.uniform(k_w, (Out, In), minval=-bound, maxval=bound,
                                dtype=jnp.float32)
    bias = jax.random.uniform(k_b, (Out,), minval=-bound, maxval=bound,
                              dtype=jnp.float32)

    out = fused_add_linear_relu(x, y, weight, bias)
    out = jax.block_until_ready(out)

    out_ref = reference(x, y, weight, bias)
    assert out.shape == (B, Out)
    assert jnp.allclose(out, out_ref, atol=1e-5, rtol=1e-5), "mismatch vs reference"

    print("KERNEL_OK")
</pallas_src>

<mosaic_0001>
module attributes {stable_mosaic.version = 11 : i64} {
  func.func @fused_add_linear_relu_kernel(%arg0: memref<8x100xf32, #tpu.memory_space<vmem>>, %arg1: memref<8x100xf32, #tpu.memory_space<vmem>>, %arg2: memref<128x100xf32, #tpu.memory_space<vmem>>, %arg3: memref<1x128xf32, #tpu.memory_space<vmem>>, %arg4: memref<8x128xf32, #tpu.memory_space<vmem>>) attributes {dimension_semantics = [], scalar_prefetch = 0 : i64, scratch_operands = 0 : i64, tpu.core_type = #tpu.core_type<tc>} {
    %c0 = arith.constant 0 : index
    %c0_0 = arith.constant 0 : index
    %0 = vector.load %arg0[%c0, %c0_0] : memref<8x100xf32, #tpu.memory_space<vmem>>, vector<8x100xf32>
    %c0_1 = arith.constant 0 : index
    %c0_2 = arith.constant 0 : index
    %1 = vector.load %arg1[%c0_1, %c0_2] : memref<8x100xf32, #tpu.memory_space<vmem>>, vector<8x100xf32>
    %2 = arith.addf %0, %1 : vector<8x100xf32>
    %c0_3 = arith.constant 0 : index
    %c0_4 = arith.constant 0 : index
    %3 = vector.load %arg2[%c0_3, %c0_4] : memref<128x100xf32, #tpu.memory_space<vmem>>, vector<128x100xf32>
    %cst = arith.constant dense<0.000000e+00> : vector<8x128xf32>
    %4 = tpu.matmul %2, %3, %cst {dimension_numbers = #tpu.dot_dimension_numbers<[1], [1], [0], [0], [0, 0, 1, 0], [], []>} : vector<8x100xf32>, vector<128x100xf32>, vector<8x128xf32> -> vector<8x128xf32>
    %c0_5 = arith.constant 0 : index
    %c0_6 = arith.constant 0 : index
    %5 = vector.load %arg3[%c0_5, %c0_6] : memref<1x128xf32, #tpu.memory_space<vmem>>, vector<1x128xf32>
    %6 = vector.broadcast %5 : vector<1x128xf32> to vector<8x128xf32>
    %7 = arith.addf %4, %6 : vector<8x128xf32>
    %cst_7 = arith.constant 0.000000e+00 : f32
    %8 = vector.broadcast %cst_7 : f32 to vector<8x128xf32>
    %9 = arith.maximumf %7, %8 : vector<8x128xf32>
    %c0_8 = arith.constant 0 : index
    %c0_9 = arith.constant 0 : index
    %10 = vector.load %arg4[%c0_8, %c0_9] : memref<8x128xf32, #tpu.memory_space<vmem>>, vector<8x128xf32>
    tpu.vector_store %arg4[%c0_8, %c0_9], %9 {strides = array<i32>} : memref<8x128xf32, #tpu.memory_space<vmem>>, vector<8x128xf32>,
    return
  }
}

</mosaic_0001>

<llo_original>
// kernel: tpu_custom_call.1
$region0: #{tpu_custom_call.1}
  #allocation0 [shape = 'u32[]', space=smem, size = 0x4, offset = 0x4, fixed_abs, tag = 'smem constant byte address 0x4 - core index']
  #allocation1 [shape = 'u32[144,128]{1,0:T(1,128)}', space=vmem, size = 0x12000, scoped, tag = 'internal scratch']
  %s0 = inlined_call_operand.vmem [shape: f32[8,100], index: 0, kind: input, shape index: {}]
  %s1 = inlined_call_operand.vmem [shape: f32[8,100], index: 1, kind: input, shape index: {}]
  %s2 = inlined_call_operand.vmem [shape: f32[128,100], index: 2, kind: input, shape index: {}]
  %s3 = inlined_call_operand.vmem [shape: f32[1,128], index: 3, kind: input, shape index: {}]
  %s4 = inlined_call_operand.hbm [shape: f32[8,128], index: 4, kind: output, shape index: {}]
  %s5 = sld [smem:[#allocation0]]
  $region26: #{tpu_custom_call.1} parent=0
    _
  %s7 = ssub.s32 1, %s5
  %s8 = scalar_select 0, %s7, %s5
  $region1: #{tpu_custom_call.1} parent=0
    #allocation2 [shape = 'u8[4096]{0}', space=vmem, size = 0x1000, scoped, tag = 'output window, operand 0, single buffered']
    #allocation3 [shape = 's32[1]{0}', space=sflag, size = 0x4, scoped, tag = 'scoped memory for tpu_custom_call.1']
    %9 = vsyncpa [#allocation3], 0
    // Predicated region
    $region2: #{tpu_custom_call.1} parent=1 // pred_check
      _
    $region3: #{tpu_custom_call.1} parent=1 // pred_check_branch
      %11 = sbr.rel (0) target = $region5
    $region4: #{tpu_custom_call.1} parent=1 // pred_region
      _
    $region5: #{tpu_custom_call.1} parent=1 // pred_fallthru
      _
    // Predicated region
    $region6: #{tpu_custom_call.1} parent=1 // pred_check
      _
    $region7: #{tpu_custom_call.1} parent=1 // pred_check_branch
      %13 = sbr.rel (0) target = $region9
    $region8: #{tpu_custom_call.1} parent=1 // pred_region
      _
    $region9: #{tpu_custom_call.1} parent=1 // pred_fallthru
      _
    // Predicated region
    $region10: #{tpu_custom_call.1} parent=1 // pred_check
      _
    $region11: #{tpu_custom_call.1} parent=1 // pred_check_branch
      %15 = sbr.rel (0) target = $region13
    $region12: #{tpu_custom_call.1} parent=1 // pred_region
      _
    $region13: #{tpu_custom_call.1} parent=1 // pred_fallthru
      _
    // Predicated region
    $region14: #{tpu_custom_call.1} parent=1 // pred_check
      _
    $region15: #{tpu_custom_call.1} parent=1 // pred_check_branch
      %17 = sbr.rel (0) target = $region17
    $region16: #{tpu_custom_call.1} parent=1 // pred_region
      _
    $region17: #{tpu_custom_call.1} parent=1 // pred_fallthru
      _
    %v18 = vld [vmem:[%s0] sm:$0xff]
    %v19 = vld [vmem:[%s1] sm:$0xff]
    %v20 = vadd.f32 %v18, %v19
    %v21 = vld [vmem:[%s2] sm:$0xff]
    %v22 = vld [vmem:[%s2 + $0x8] sm:$0xff]
    %v23 = vld [vmem:[%s2 + $0x10] sm:$0xff]
    %v24 = vld [vmem:[%s2 + $0x18] sm:$0xff]
    %v25 = vld [vmem:[%s2 + $0x20] sm:$0xff]
    %v26 = vld [vmem:[%s2 + $0x28] sm:$0xff]
    %v27 = vld [vmem:[%s2 + $0x30] sm:$0xff]
    %v28 = vld [vmem:[%s2 + $0x38] sm:$0xff]
    %v29 = vld [vmem:[%s2 + $0x40] sm:$0xff]
    %v30 = vld [vmem:[%s2 + $0x48] sm:$0xff]
    %v31 = vld [vmem:[%s2 + $0x50] sm:$0xff]
    %v32 = vld [vmem:[%s2 + $0x58] sm:$0xff]
    %v33 = vld [vmem:[%s2 + $0x60] sm:$0xff]
    %v34 = vld [vmem:[%s2 + $0x68] sm:$0xff]
    %v35 = vld [vmem:[%s2 + $0x70] sm:$0xff]
    %v36 = vld [vmem:[%s2 + $0x78] sm:$0xff]
    %v37 = vld [vmem:[%s3] sm:$0x1]
    %v39 = vlaneseq
    %v40 = vshrl.u32 %v39, 7
    %v41 = vsub.s32 0, %v40
    %v42 = vrot.slane %v37, %v41
    %vm44 = vcmask 818176
    %v46 = vsel %vm44, %v20, 0
    %v49 = vsel %vm44, %v21, 0
    %v52 = vsel %vm44, %v22, 0
    %v55 = vsel %vm44, %v23, 0
    %v58 = vsel %vm44, %v24, 0
    %v61 = vsel %vm44, %v25, 0
    %v64 = vsel %vm44, %v26, 0
    %v67 = vsel %vm44, %v27, 0
    %v70 = vsel %vm44, %v28, 0
    %v73 = vsel %vm44, %v29, 0
    %v76 = vsel %vm44, %v30, 0
    %v79 = vsel %vm44, %v31, 0
    %v82 = vsel %vm44, %v32, 0
    %v85 = vsel %vm44, %v33, 0
    %v88 = vsel %vm44, %v34, 0
    %v91 = vsel %vm44, %v35, 0
    %v94 = vsel %vm44, %v36, 0
    %96 = vmatprep.subr.mxu0 0.0
    %97 = vmatpush1.xpose.msra.mxu0 %v94
    %98 = vmatprep.subr.mxu0 0.0
    %99 = vmatpush1.xpose.msra.mxu0 %v91
    %100 = vmatprep.subr.mxu0 0.0
    %101 = vmatpush1.xpose.msra.mxu0 %v88
    %102 = vmatprep.subr.mxu0 0.0
    %103 = vmatpush1.xpose.msra.mxu0 %v85
    %104 = vmatprep.subr.mxu0 0.0
    %105 = vmatpush1.xpose.msra.mxu0 %v82
    %106 = vmatprep.subr.mxu0 0.0
    %107 = vmatpush1.xpose.msra.mxu0 %v79
    %108 = vmatprep.subr.mxu0 0.0
    %109 = vmatpush1.xpose.msra.mxu0 %v76
    %110 = vmatprep.subr.mxu0 0.0
    %111 = vmatpush1.xpose.msra.mxu0 %v73
    %112 = vmatprep.subr.mxu0 0.0
    %113 = vmatpush1.xpose.msra.mxu0 %v70
    %114 = vmatprep.subr.mxu0 0.0
    %115 = vmatpush1.xpose.msra.mxu0 %v67
    %116 = vmatprep.subr.mxu0 0.0
    %117 = vmatpush1.xpose.msra.mxu0 %v64
    %118 = vmatprep.subr.mxu0 0.0
    %119 = vmatpush1.xpose.msra.mxu0 %v61
    %120 = vmatprep.subr.mxu0 0.0
    %121 = vmatpush1.xpose.msra.mxu0 %v58
    %122 = vmatprep.subr.mxu0 0.0
    %123 = vmatpush1.xpose.msra.mxu0 %v55
    %124 = vmatprep.subr.mxu0 0.0
    %125 = vmatpush1.xpose.msra.mxu0 %v52
    %126 = vmatprep.subr.mxu0 0.0
    %127 = vmatpush1.xpose.msra.mxu0 %v49
    %128 = vmatprep.subr.mxu0 0.0
    %129 = vmatpush2.xpose.msra.mxu0 0.0
    %130 = vmatprep.subr.mxu0 0.0
    %131 = vmatpush2.xpose.msra.mxu0 0.0
    %132 = vmatprep.subr.mxu0 0.0
    %133 = vmatpush2.xpose.msra.mxu0 0.0
    %134 = vmatprep.subr.mxu0 0.0
    %135 = vmatpush2.xpose.msra.mxu0 0.0
    %136 = vmatprep.subr.mxu0 0.0
    %137 = vmatpush2.xpose.msra.mxu0 0.0
    %138 = vmatprep.subr.mxu0 0.0
    %139 = vmatpush2.xpose.msra.mxu0 0.0
    %140 = vmatprep.subr.mxu0 0.0
    %141 = vmatpush2.xpose.msra.mxu0 0.0
    %142 = vmatprep.subr.mxu0 0.0
    %143 = vmatpush2.xpose.msra.mxu0 0.0
    %144 = vmatprep.subr.mxu0 0.0
    %145 = vmatpush2.xpose.msra.mxu0 0.0
    %146 = vmatprep.subr.mxu0 0.0
    %147 = vmatpush2.xpose.msra.mxu0 0.0
    %148 = vmatprep.subr.mxu0 0.0
    %149 = vmatpush2.xpose.msra.mxu0 0.0
    %150 = vmatprep.subr.mxu0 0.0
    %151 = vmatpush2.xpose.msra.mxu0 0.0
    %152 = vmatprep.subr.mxu0 0.0
    %153 = vmatpush2.xpose.msra.mxu0 0.0
    %154 = vmatprep.subr.mxu0 0.0
    %155 = vmatpush2.xpose.msra.mxu0 0.0
    %156 = vmatprep.subr.mxu0 0.0
    %157 = vmatpush2.xpose.msra.mxu0 0.0
    %158 = vmatprep.subr.mxu0 0.0
    %159 = vmatpush2.xpose.msra.mxu0 0.0
    %160 = vmatprep.mubr.f32.mxu0 0.0
    %161 = vmatmul.mubr.f32.gmra.mxu0 %v46
    %v162 = vpop.f32.mrf.mxu0
    %v163 = vadd.f32 %v42, %v162
    %v164 = vpop.f32.mrf.mxu0
    %165 = vdwg.mxu0
    %v166 = vmax.f32 %v163, 0.0
    %167 = vst [vmem:[#allocation2] sm:$0xff] %v166
    // Predicated region
    $region18: #{tpu_custom_call.1} parent=1 // pred_check
      _
    $region19: #{tpu_custom_call.1} parent=1 // pred_check_branch
      %169 = sbr.rel (0) target = $region21
    $region20: #{tpu_custom_call.1} parent=1 // pred_region
      %s171 = ssub.s32 128, 128
      %172 = vsyncadd [#allocation3], %s171
      %s174 = sshll.u32 [#allocation2], 4
      %s175 = int_to_ptr.vmem [resolvable:$true] %s174
      %177 = dma.vmem_to_hbm [thread:$0]  %s175, 128, %s4, [#allocation3]
    $region21: #{tpu_custom_call.1} parent=1 // pred_fallthru
      _
    // Predicated region
    $region22: #{tpu_custom_call.1} parent=1 // pred_check
      _
    $region23: #{tpu_custom_call.1} parent=1 // pred_check_branch
      %179 = sbr.rel (0) target = $region25
    $region24: #{tpu_custom_call.1} parent=1 // pred_region
      %180 = dma.done [#allocation3], 128
    $region25: #{tpu_custom_call.1} parent=1 // pred_fallthru
      _
    %181 = vsyncpa [#allocation3], 1

</llo_original>
